<compile_context>
chip_gen: v7x
topology: tpu7x:2x2x1
jax: 0.10.0
libtpu: 0.0.40
codegen_flags: <defaults>
</compile_context>

<pallas_src>
import functools
import math

import jax
import jax.numpy as jnp
from jax.experimental import pallas as pl
from jax.experimental.pallas import tpu as pltpu

DX = math.sqrt(512.0)  # matches self.dx = np.sqrt(512)


# ---------------------------------------------------------------------------
# Prologue kernel: hoisted 1x1-conv projections (one pass over the input).
# ---------------------------------------------------------------------------
def proj_kernel(q_ref, k_ref, v_ref,
                wq_ref, bq_ref, wk_ref, bk_ref, wv_ref, bv_ref,
                pq_ref, pk_ref, pv_ref):
    # q/k/v: (1, C, tn) f32   wq/wk: (Cq, C)  bq/bk: (Cq, 1)  wv: (C, C)  bv: (1, C)
    # pq/pk out: (1, Cq, tn) bf16 (pq pre-scaled by 1/sqrt(512))
    # pv  out: (1, tn, C) bf16 (key-major so attn@V is a canonical matmul)
    pq = jnp.dot(wq_ref[...], q_ref[0], preferred_element_type=jnp.float32) + bq_ref[...]
    pq_ref[0] = (pq * (1.0 / DX)).astype(pq_ref.dtype)

    pk = jnp.dot(wk_ref[...], k_ref[0], preferred_element_type=jnp.float32) + bk_ref[...]
    pk_ref[0] = pk.astype(pk_ref.dtype)

    # value projection directly in (tn, C) layout: contract C of v with C of wv
    # via dot_general dimension numbers -> no XLU transpose needed.
    pv = jax.lax.dot_general(v_ref[0], wv_ref[...], (((0,), (1,)), ((), ())),
                             preferred_element_type=jnp.float32) + bv_ref[...]
    pv_ref[0] = pv.astype(pv_ref.dtype)


# ---------------------------------------------------------------------------
# Main kernel: flash attention over precomputed projections + residual add.
# ---------------------------------------------------------------------------
def pam_attn_kernel(pq_ref, pk_ref, pv_ref, vres_ref, out_ref,
                    m_s, l_s, acc_s, *, n_valid, n_total):
    # pq_ref: (1, Cq, tq) bf16   pk_ref: (1, Cq, tk) bf16   pv_ref: (1, tk, C) bf16
    # vres_ref/out_ref: (1, C, tq) f32
    # m_s/l_s: (tq, 1) f32       acc_s: (tq, C) f32
    ki = pl.program_id(2)

    @pl.when(ki == 0)
    def _init():
        m_s[...] = jnp.full_like(m_s, -jnp.inf)
        l_s[...] = jnp.zeros_like(l_s)
        acc_s[...] = jnp.zeros_like(acc_s)

    # Energy tile (tq, tk): bf16 MXU operands, f32 accumulation.  Contract dim 0
    # (Cq) of both operands -> no lane-sparse (tq, Cq) intermediate.
    s = jax.lax.dot_general(pq_ref[0], pk_ref[0], (((0,), (0,)), ((), ())),
                            preferred_element_type=jnp.float32)

    if n_valid != n_total:  # trace-time switch: mask padded key columns (f32-safe)
        tk = s.shape[-1]
        col = ki * tk + jax.lax.broadcasted_iota(jnp.int32, (1, tk), 1)
        s = jnp.where(col < n_valid, s, -1e30)

    # --- online (flash) softmax over key tiles ---
    m_prev = m_s[...]
    m_new = jnp.maximum(m_prev, jnp.max(s, axis=-1, keepdims=True))    # (tq, 1)
    alpha = jnp.exp(m_prev - m_new)                                    # (tq, 1)
    p = jnp.exp(s - m_new)                                             # (tq, tk) f32

    l_s[...] = alpha * l_s[...] + jnp.sum(p, axis=-1, keepdims=True)
    # attn @ V as canonical (tq, tk) @ (tk, C) -> no per-step transpose.
    acc_s[...] = alpha * acc_s[...] + jnp.dot(
        p.astype(jnp.bfloat16), pv_ref[0], preferred_element_type=jnp.float32)
    m_s[...] = m_new

    @pl.when(ki == pl.num_programs(2) - 1)
    def _finalize():
        inv_l = pl.reciprocal(l_s[...], approx=True)                   # EUP vrcp
        out_tc = acc_s[...] * inv_l                                    # (tq, C)
        # one small (tq, C) transpose per query tile; residual add with raw v.
        out_ref[0] = (out_tc.T + vres_ref[0]).astype(out_ref.dtype)


def _round_up(x, m):
    return ((x + m - 1) // m) * m


def pam_module(q, k, v, params, *, tq=256, tk=256):
    """q, k, v: (B, C, H, W) float32.  Returns (B, C, H, W)."""
    B, C, H, W = q.shape
    N = H * W
    Cq = params["wq"].shape[0]

    # Shrink tiles for tiny spatial extents; keep lane alignment (multiples of 128).
    tq = min(tq, _round_up(N, 128))
    tk = min(tk, _round_up(N, 128))
    n_pad = _round_up(N, max(tq, tk))
    assert n_pad % tq == 0 and n_pad % tk == 0

    def flat_pad(x):
        xf = x.reshape(B, C, N)
        if n_pad != N:
            xf = jnp.pad(xf, ((0, 0), (0, 0), (0, n_pad - N)))
        return xf

    qf, kf, vf = flat_pad(q), flat_pad(k), flat_pad(v)

    # ---------------- prologue: hoisted projections (one shot) ----------------
    tn = tk
    x_spec = pl.BlockSpec((1, C, tn), lambda b, n: (b, 0, n))
    wqk_spec = pl.BlockSpec((Cq, C), lambda b, n: (0, 0))
    bqk_spec = pl.BlockSpec((Cq, 1), lambda b, n: (0, 0))
    wv_spec = pl.BlockSpec((C, C), lambda b, n: (0, 0))
    bv_spec = pl.BlockSpec((1, C), lambda b, n: (0, 0))
    pqk_out_spec = pl.BlockSpec((1, Cq, tn), lambda b, n: (b, 0, n))
    pv_out_spec = pl.BlockSpec((1, tn, C), lambda b, n: (b, n, 0))

    pq, pk, pv = pl.pallas_call(
        proj_kernel,
        out_shape=(jax.ShapeDtypeStruct((B, Cq, n_pad), jnp.bfloat16),
                   jax.ShapeDtypeStruct((B, Cq, n_pad), jnp.bfloat16),
                   jax.ShapeDtypeStruct((B, n_pad, C), jnp.bfloat16)),
        grid_spec=pltpu.PrefetchScalarGridSpec(
            num_scalar_prefetch=0,
            grid=(B, n_pad // tn),
            in_specs=[x_spec, x_spec, x_spec,
                      wqk_spec, bqk_spec, wqk_spec, bqk_spec, wv_spec, bv_spec],
            out_specs=[pqk_out_spec, pqk_out_spec, pv_out_spec]),
        compiler_params=pltpu.CompilerParams(
            dimension_semantics=("parallel", "parallel"),
            vmem_limit_bytes=32 * 1024 * 1024),
    )(qf, kf, vf,
      params["wq"], params["bq"], params["wk"], params["bk"],
      params["wv"], params["bv"].T)          # bv passed as (1, C) lane-dense

    # ---------------- main flash-attention loop ----------------
    grid = (B, n_pad // tq, n_pad // tk)

    pq_spec = pl.BlockSpec((1, Cq, tq), lambda b, qi, ki: (b, 0, qi))
    pk_spec = pl.BlockSpec((1, Cq, tk), lambda b, qi, ki: (b, 0, ki))
    pv_spec = pl.BlockSpec((1, tk, C), lambda b, qi, ki: (b, ki, 0))
    vres_spec = pl.BlockSpec((1, C, tq), lambda b, qi, ki: (b, 0, qi))
    out_spec = pl.BlockSpec((1, C, tq), lambda b, qi, ki: (b, 0, qi))

    kernel = functools.partial(pam_attn_kernel, n_valid=N, n_total=n_pad)

    out = pl.pallas_call(
        kernel,
        out_shape=jax.ShapeDtypeStruct((B, C, n_pad), q.dtype),
        grid_spec=pltpu.PrefetchScalarGridSpec(
            num_scalar_prefetch=0,
            grid=grid,
            in_specs=[pq_spec, pk_spec, pv_spec, vres_spec],
            out_specs=out_spec,
            scratch_shapes=[
                pltpu.VMEM((tq, 1), jnp.float32),    # running max
                pltpu.VMEM((tq, 1), jnp.float32),    # running denom
                pltpu.VMEM((tq, C), jnp.float32),    # output accumulator
            ]),
        compiler_params=pltpu.CompilerParams(
            dimension_semantics=("parallel", "parallel", "arbitrary"),
            vmem_limit_bytes=32 * 1024 * 1024),
    )(pq, pk, pv, vf)

    return out[..., :N].reshape(B, C, H, W)


def make_params(key, in_dim, reduce=32):
    cq = in_dim // reduce
    k1, k2, k3, k4, k5, k6 = jax.random.split(key, 6)
    scale = 1.0 / math.sqrt(in_dim)
    return {
        # Conv2d 1x1 weights (out_ch, in_ch); biases as (out_ch, 1) for 2D refs.
        "wq": jax.random.normal(k1, (cq, in_dim), jnp.float32) * scale,
        "bq": jax.random.normal(k2, (cq, 1), jnp.float32) * 0.1,
        "wk": jax.random.normal(k3, (cq, in_dim), jnp.float32) * scale,
        "bk": jax.random.normal(k4, (cq, 1), jnp.float32) * 0.1,
        "wv": jax.random.normal(k5, (in_dim, in_dim), jnp.float32) * scale,
        "bv": jax.random.normal(k6, (in_dim, 1), jnp.float32) * 0.1,
    }


def pam_reference(q, k, v, params):
    """Pure-JAX f32 reference replicating the PyTorch forward."""
    B, C, H, W = q.shape
    N = H * W
    qf, kf, vf = (x.reshape(B, C, N) for x in (q, k, v))
    pq = jnp.einsum("oc,bcn->bon", params["wq"], qf) + params["bq"][None]
    pk = jnp.einsum("oc,bcn->bon", params["wk"], kf) + params["bk"][None]
    pv = jnp.einsum("oc,bcn->bon", params["wv"], vf) + params["bv"][None]
    energy = jnp.einsum("bci,bcj->bij", pq, pk)
    attn = jax.nn.softmax(energy / DX, axis=-1)
    out = jnp.einsum("bcj,bij->bci", pv, attn)
    return out.reshape(B, C, H, W) + v


if __name__ == "__main__":
    # in_dim must be divisible by reduce=32; small deterministic shapes.
    B, C, H, W = 2, 64, 8, 8
    key = jax.random.PRNGKey(0)
    kq, kk, kv, kp = jax.random.split(key, 4)
    q = jax.random.normal(kq, (B, C, H, W), jnp.float32)
    k = jax.random.normal(kk, (B, C, H, W), jnp.float32)
    v = jax.random.normal(kv, (B, C, H, W), jnp.float32)
    params = make_params(kp, C)

    out = jax.block_until_ready(pam_module(q, k, v, params))
    ref = pam_reference(q, k, v, params)

    assert out.shape == (B, C, H, W)
    # bf16 projections / attention weights + approx reciprocal => loosened tol vs f32 ref.
    assert jnp.allclose(out, ref, atol=5e-2, rtol=5e-2), "mismatch vs reference"

    print("KERNEL_OK")
</pallas_src>

<mosaic_0001>
module attributes {stable_mosaic.version = 11 : i64} {
  func.func @proj_kernel(%arg0: i32, %arg1: i32, %arg2: memref<1x64x128xf32, #tpu.memory_space<vmem>>, %arg3: memref<1x64x128xf32, #tpu.memory_space<vmem>>, %arg4: memref<1x64x128xf32, #tpu.memory_space<vmem>>, %arg5: memref<2x64xf32, #tpu.memory_space<vmem>>, %arg6: memref<2x1xf32, #tpu.memory_space<vmem>>, %arg7: memref<2x64xf32, #tpu.memory_space<vmem>>, %arg8: memref<2x1xf32, #tpu.memory_space<vmem>>, %arg9: memref<64x64xf32, #tpu.memory_space<vmem>>, %arg10: memref<1x64xf32, #tpu.memory_space<vmem>>, %arg11: memref<1x2x128xbf16, #tpu.memory_space<vmem>>, %arg12: memref<1x2x128xbf16, #tpu.memory_space<vmem>>, %arg13: memref<1x128x64xbf16, #tpu.memory_space<vmem>>) attributes {dimension_semantics = [#tpu.dimension_semantics<parallel>, #tpu.dimension_semantics<parallel>], iteration_bounds = array<i64: 2, 1>, scalar_prefetch = 0 : i64, scratch_operands = 0 : i64, tpu.core_type = #tpu.core_type<tc>, window_params = [{transform_indices = @transform_0, window_bounds = array<i64: 1, 64, 128>}, {transform_indices = @transform_1, window_bounds = array<i64: 1, 64, 128>}, {transform_indices = @transform_2, window_bounds = array<i64: 1, 64, 128>}, {pipeline_mode = #tpu.pipeline_mode<synchronous>, transform_indices = @transform_3, window_bounds = array<i64: 2, 64>}, {pipeline_mode = #tpu.pipeline_mode<synchronous>, transform_indices = @transform_4, window_bounds = array<i64: 2, 1>}, {pipeline_mode = #tpu.pipeline_mode<synchronous>, transform_indices = @transform_5, window_bounds = array<i64: 2, 64>}, {pipeline_mode = #tpu.pipeline_mode<synchronous>, transform_indices = @transform_6, window_bounds = array<i64: 2, 1>}, {pipeline_mode = #tpu.pipeline_mode<synchronous>, transform_indices = @transform_7, window_bounds = array<i64: 64, 64>}, {pipeline_mode = #tpu.pipeline_mode<synchronous>, transform_indices = @transform_8, window_bounds = array<i64: 1, 64>}, {transform_indices = @transform_9, window_bounds = array<i64: 1, 2, 128>}, {transform_indices = @transform_10, window_bounds = array<i64: 1, 2, 128>}, {transform_indices = @transform_11, window_bounds = array<i64: 1, 128, 64>}]} {
    %c0 = arith.constant 0 : index
    %c0_0 = arith.constant 0 : index
    %0 = vector.load %arg5[%c0, %c0_0] : memref<2x64xf32, #tpu.memory_space<vmem>>, vector<2x64xf32>
    %c0_1 = arith.constant 0 : index
    %c0_2 = arith.constant 0 : index
    %c0_3 = arith.constant 0 : index
    %1 = vector.load %arg2[%c0_1, %c0_2, %c0_3] : memref<1x64x128xf32, #tpu.memory_space<vmem>>, vector<1x64x128xf32>
    %2 = vector.shape_cast %1 : vector<1x64x128xf32> to vector<64x128xf32>
    %cst = arith.constant dense<0.000000e+00> : vector<2x128xf32>
    %3 = tpu.matmul %0, %2, %cst {dimension_numbers = #tpu.dot_dimension_numbers<[1], [0], [0], [1], [0, 0, 1, 1], [], []>} : vector<2x64xf32>, vector<64x128xf32>, vector<2x128xf32> -> vector<2x128xf32>
    %c0_4 = arith.constant 0 : index
    %c0_5 = arith.constant 0 : index
    %4 = vector.load %arg6[%c0_4, %c0_5] : memref<2x1xf32, #tpu.memory_space<vmem>>, vector<2x1xf32>
    %5 = vector.broadcast %4 : vector<2x1xf32> to vector<2x128xf32>
    %6 = arith.addf %3, %5 : vector<2x128xf32>
    %cst_6 = arith.constant 0.0441941731 : f32
    %7 = vector.broadcast %cst_6 : f32 to vector<2x128xf32>
    %8 = arith.mulf %6, %7 : vector<2x128xf32>
    %9 = arith.truncf %8 : vector<2x128xf32> to vector<2x128xbf16>
    %c0_7 = arith.constant 0 : index
    %c0_8 = arith.constant 0 : index
    %c0_9 = arith.constant 0 : index
    %10 = vector.load %arg11[%c0_7, %c0_8, %c0_9] : memref<1x2x128xbf16, #tpu.memory_space<vmem>>, vector<1x2x128xbf16>
    %11 = vector.shape_cast %10 : vector<1x2x128xbf16> to vector<2x128xbf16>
    %12 = vector.shape_cast %9 : vector<2x128xbf16> to vector<1x2x128xbf16>
    tpu.vector_store %arg11[%c0_7, %c0_8, %c0_9], %12 {strides = array<i32>} : memref<1x2x128xbf16, #tpu.memory_space<vmem>>, vector<1x2x128xbf16>,
    %c0_10 = arith.constant 0 : index
    %c0_11 = arith.constant 0 : index
    %13 = vector.load %arg7[%c0_10, %c0_11] : memref<2x64xf32, #tpu.memory_space<vmem>>, vector<2x64xf32>
    %c0_12 = arith.constant 0 : index
    %c0_13 = arith.constant 0 : index
    %c0_14 = arith.constant 0 : index
    %14 = vector.load %arg3[%c0_12, %c0_13, %c0_14] : memref<1x64x128xf32, #tpu.memory_space<vmem>>, vector<1x64x128xf32>
    %15 = vector.shape_cast %14 : vector<1x64x128xf32> to vector<64x128xf32>
    %cst_15 = arith.constant dense<0.000000e+00> : vector<2x128xf32>
    %16 = tpu.matmul %13, %15, %cst_15 {dimension_numbers = #tpu.dot_dimension_numbers<[1], [0], [0], [1], [0, 0, 1, 1], [], []>} : vector<2x64xf32>, vector<64x128xf32>, vector<2x128xf32> -> vector<2x128xf32>
    %c0_16 = arith.constant 0 : index
    %c0_17 = arith.constant 0 : index
    %17 = vector.load %arg8[%c0_16, %c0_17] : memref<2x1xf32, #tpu.memory_space<vmem>>, vector<2x1xf32>
    %18 = vector.broadcast %17 : vector<2x1xf32> to vector<2x128xf32>
    %19 = arith.addf %16, %18 : vector<2x128xf32>
    %20 = arith.truncf %19 : vector<2x128xf32> to vector<2x128xbf16>
    %c0_18 = arith.constant 0 : index
    %c0_19 = arith.constant 0 : index
    %c0_20 = arith.constant 0 : index
    %21 = vector.load %arg12[%c0_18, %c0_19, %c0_20] : memref<1x2x128xbf16, #tpu.memory_space<vmem>>, vector<1x2x128xbf16>
    %22 = vector.shape_cast %21 : vector<1x2x128xbf16> to vector<2x128xbf16>
    %23 = vector.shape_cast %20 : vector<2x128xbf16> to vector<1x2x128xbf16>
    tpu.vector_store %arg12[%c0_18, %c0_19, %c0_20], %23 {strides = array<i32>} : memref<1x2x128xbf16, #tpu.memory_space<vmem>>, vector<1x2x128xbf16>,
    %c0_21 = arith.constant 0 : index
    %c0_22 = arith.constant 0 : index
    %c0_23 = arith.constant 0 : index
    %24 = vector.load %arg4[%c0_21, %c0_22, %c0_23] : memref<1x64x128xf32, #tpu.memory_space<vmem>>, vector<1x64x128xf32>
    %25 = vector.shape_cast %24 : vector<1x64x128xf32> to vector<64x128xf32>
    %c0_24 = arith.constant 0 : index
    %c0_25 = arith.constant 0 : index
    %26 = vector.load %arg9[%c0_24, %c0_25] : memref<64x64xf32, #tpu.memory_space<vmem>>, vector<64x64xf32>
    %cst_26 = arith.constant dense<0.000000e+00> : vector<128x64xf32>
    %27 = tpu.matmul %25, %26, %cst_26 {dimension_numbers = #tpu.dot_dimension_numbers<[0], [1], [1], [0], [0, 1, 1, 0], [], []>} : vector<64x128xf32>, vector<64x64xf32>, vector<128x64xf32> -> vector<128x64xf32>
    %c0_27 = arith.constant 0 : index
    %c0_28 = arith.constant 0 : index
    %28 = vector.load %arg10[%c0_27, %c0_28] : memref<1x64xf32, #tpu.memory_space<vmem>>, vector<1x64xf32>
    %29 = vector.broadcast %28 : vector<1x64xf32> to vector<128x64xf32>
    %30 = arith.addf %27, %29 : vector<128x64xf32>
    %31 = arith.truncf %30 : vector<128x64xf32> to vector<128x64xbf16>
    %c0_29 = arith.constant 0 : index
    %c0_30 = arith.constant 0 : index
    %c0_31 = arith.constant 0 : index
    %32 = vector.load %arg13[%c0_29, %c0_30, %c0_31] : memref<1x128x64xbf16, #tpu.memory_space<vmem>>, vector<1x128x64xbf16>
    %33 = vector.shape_cast %32 : vector<1x128x64xbf16> to vector<128x64xbf16>
    %34 = vector.shape_cast %31 : vector<128x64xbf16> to vector<1x128x64xbf16>
    tpu.vector_store %arg13[%c0_29, %c0_30, %c0_31], %34 {strides = array<i32>} : memref<1x128x64xbf16, #tpu.memory_space<vmem>>, vector<1x128x64xbf16>,
    return
  }
  func.func @transform_0(%arg0: i32, %arg1: i32) -> (i32, i32, i32) {
    %c0_i32 = arith.constant 0 : i32
    %c0_i32_0 = arith.constant 0 : i32
    return %arg0, %c0_i32, %arg1 : i32, i32, i32
  }
  func.func @transform_1(%arg0: i32, %arg1: i32) -> (i32, i32, i32) {
    %c0_i32 = arith.constant 0 : i32
    %c0_i32_0 = arith.constant 0 : i32
    return %arg0, %c0_i32, %arg1 : i32, i32, i32
  }
  func.func @transform_2(%arg0: i32, %arg1: i32) -> (i32, i32, i32) {
    %c0_i32 = arith.constant 0 : i32
    %c0_i32_0 = arith.constant 0 : i32
    return %arg0, %c0_i32, %arg1 : i32, i32, i32
  }
  func.func @transform_3(%arg0: i32, %arg1: i32) -> (i32, i32) {
    %c0_i32 = arith.constant 0 : i32
    %c0_i32_0 = arith.constant 0 : i32
    %c0_i32_1 = arith.constant 0 : i32
    return %c0_i32, %c0_i32_0 : i32, i32
  }
  func.func @transform_4(%arg0: i32, %arg1: i32) -> (i32, i32) {
    %c0_i32 = arith.constant 0 : i32
    %c0_i32_0 = arith.constant 0 : i32
    %c0_i32_1 = arith.constant 0 : i32
    return %c0_i32, %c0_i32_0 : i32, i32
  }
  func.func @transform_5(%arg0: i32, %arg1: i32) -> (i32, i32) {
    %c0_i32 = arith.constant 0 : i32
    %c0_i32_0 = arith.constant 0 : i32
    %c0_i32_1 = arith.constant 0 : i32
    return %c0_i32, %c0_i32_0 : i32, i32
  }
  func.func @transform_6(%arg0: i32, %arg1: i32) -> (i32, i32) {
    %c0_i32 = arith.constant 0 : i32
    %c0_i32_0 = arith.constant 0 : i32
    %c0_i32_1 = arith.constant 0 : i32
    return %c0_i32, %c0_i32_0 : i32, i32
  }
  func.func @transform_7(%arg0: i32, %arg1: i32) -> (i32, i32) {
    %c0_i32 = arith.constant 0 : i32
    %c0_i32_0 = arith.constant 0 : i32
    %c0_i32_1 = arith.constant 0 : i32
    return %c0_i32, %c0_i32_0 : i32, i32
  }
  func.func @transform_8(%arg0: i32, %arg1: i32) -> (i32, i32) {
    %c0_i32 = arith.constant 0 : i32
    %c0_i32_0 = arith.constant 0 : i32
    %c0_i32_1 = arith.constant 0 : i32
    return %c0_i32, %c0_i32_0 : i32, i32
  }
  func.func @transform_9(%arg0: i32, %arg1: i32) -> (i32, i32, i32) {
    %c0_i32 = arith.constant 0 : i32
    %c0_i32_0 = arith.constant 0 : i32
    return %arg0, %c0_i32, %arg1 : i32, i32, i32
  }
  func.func @transform_10(%arg0: i32, %arg1: i32) -> (i32, i32, i32) {
    %c0_i32 = arith.constant 0 : i32
    %c0_i32_0 = arith.constant 0 : i32
    return %arg0, %c0_i32, %arg1 : i32, i32, i32
  }
  func.func @transform_11(%arg0: i32, %arg1: i32) -> (i32, i32, i32) {
    %c0_i32 = arith.constant 0 : i32
    %c0_i32_0 = arith.constant 0 : i32
    return %arg0, %arg1, %c0_i32 : i32, i32, i32
  }
}

</mosaic_0001>

<llo_original>
// kernel: tpu_custom_call.1
$region0: #{tpu_custom_call.1}
  #allocation0 [shape = 'u32[]', space=smem, size = 0x4, offset = 0x4, fixed_abs, tag = 'smem constant byte address 0x4 - core index']
  #allocation1 [shape = 'u32[144,128]{1,0:T(1,128)}', space=vmem, size = 0x12000, scoped, tag = 'internal scratch']
  %s0 = inlined_call_operand.hbm [shape: f32[2,64,128], index: 0, kind: input, shape index: {}]
  %s1 = inlined_call_operand.hbm [shape: f32[2,64,128], index: 1, kind: input, shape index: {}]
  %s2 = inlined_call_operand.hbm [shape: f32[2,64,128], index: 2, kind: input, shape index: {}]
  %s3 = inlined_call_operand.vmem [shape: f32[2,64], index: 3, kind: input, shape index: {}]
  %s4 = inlined_call_operand.vmem [shape: f32[2,1], index: 4, kind: input, shape index: {}]
  %s5 = inlined_call_operand.vmem [shape: f32[2,64], index: 5, kind: input, shape index: {}]
  %s6 = inlined_call_operand.vmem [shape: f32[2,1], index: 6, kind: input, shape index: {}]
  %s7 = inlined_call_operand.hbm [shape: f32[64,64], index: 7, kind: input, shape index: {}]
  %s8 = inlined_call_operand.vmem [shape: f32[1,64], index: 8, kind: input, shape index: {}]
  %s9 = inlined_call_operand.hbm [shape: bf16[2,2,128], index: 9, kind: output, shape index: {0}]
  %s10 = inlined_call_operand.hbm [shape: bf16[2,2,128], index: 10, kind: output, shape index: {1}]
  %s11 = inlined_call_operand.vmem [shape: bf16[2,128,64], index: 11, kind: output, shape index: {2}]
  %12 = xla_tuple %s9, %s10, %s11
  %s13 = sld [smem:[#allocation0]]
  $region101: #{tpu_custom_call.1} parent=0
    _
  %s15 = ssub.s32 1, %s13
  %s16 = scalar_select 0, %s15, %s13
  $region1: #{tpu_custom_call.1} parent=0
    #allocation2 [shape = 'u8[65536]{0}', space=vmem, size = 0x10000, scoped, tag = 'input window, operand 0']
    #allocation3 [shape = 's32[2]{0}', space=sflag, size = 0x8, scoped, tag = 'scoped memory for tpu_custom_call.1']
    #allocation4 [shape = 's32[2]{0}', space=sflag, size = 0x8, scoped, tag = 'scoped memory for tpu_custom_call.1']
    #allocation5 [shape = 'u8[65536]{0}', space=vmem, size = 0x10000, scoped, tag = 'input window, operand 1']
    #allocation6 [shape = 's32[2]{0}', space=sflag, size = 0x8, scoped, tag = 'scoped memory for tpu_custom_call.1']
    #allocation7 [shape = 'u8[65536]{0}', space=vmem, size = 0x10000, scoped, tag = 'input window, operand 2']
    #allocation8 [shape = 'u8[32768]{0}', space=vmem, size = 0x8000, scoped, tag = 'input window, operand 7, single buffered']
    #allocation9 [shape = 's32[1]{0}', space=sflag, size = 0x4, scoped, tag = 'scoped memory for tpu_custom_call.1']
    #allocation10 [shape = 'u8[1024]{0}', space=vmem, size = 0x400, scoped, tag = 'output window, operand 0']
    #allocation11 [shape = 'u8[1024]{0}', space=vmem, size = 0x400, scoped, tag = 'output window, operand 1']
    #allocation12 [shape = 's32[2]{0}', space=sflag, size = 0x8, scoped, tag = 'scoped memory for tpu_custom_call.1']
    %17 = vsyncpa [#allocation3], 0
    %s18 = scalar_lea.sflag [#allocation3], 1
    %19 = vsyncpa %s18, 0
    %20 = vsyncpa [#allocation6], 0
    %s21 = scalar_lea.sflag [#allocation6], 1
    %22 = vsyncpa %s21, 0
    %23 = vsyncpa [#allocation9], 0
    %24 = vsyncpa [#allocation4], 0
    %s25 = scalar_lea.sflag [#allocation4], 1
    %26 = vsyncpa %s25, 0
    %27 = vsyncpa [#allocation12], 0
    %s28 = scalar_lea.sflag [#allocation12], 1
    %29 = vsyncpa %s28, 0
    loop: start=0, step=1, limit=4
    $region2: #{tpu_custom_call.1} parent=1 // loop_pre_header
      _
    $region3: #{tpu_custom_call.1} parent=1 // loop_header
      %s31 = sphi 0, %s35
      %p32 = scmp.ge.s32.totalorder %s31, 4
      %s38 = sphi 0, %s50
      %s39 = sphi 0, %s46
      %s40 = sphi 0, %s38
      %s41 = sphi 0, %s39
      %s42 = sphi 0, %s40
      %s43 = sphi 0, %s41
      %s55 = sphi 0, %s57
      %s58 = sphi 0, %s55
      %s59 = sphi 0, %s58
      %s75 = sphi 0, %s59
      %s83 = sphi 0, %s85
      %s86 = sphi 0, %s83
      %s87 = sphi 0, %s86
      %s103 = sphi 0, %s87
      %s111 = sphi 0, %s113
      %s114 = sphi 0, %s111
      %s115 = sphi 0, %s114
      %s131 = sphi 0, %s115
      %s135 = sphi 0, %s135
      %s137 = sphi 0, %s135
      %s138 = sphi 0, %s137
      %s152 = sphi 0, %s138
      %s156 = sphi 0, %s156
      %s158 = sphi 0, %s156
      %s159 = sphi 0, %s158
      %s173 = sphi 0, %s159
      %s177 = sphi 0, %s177
      %s179 = sphi 0, %s177
      %s180 = sphi 0, %s179
      %s194 = sphi 0, %s180
      %s198 = sphi 0, %s198
      %s200 = sphi 0, %s198
      %s201 = sphi 0, %s200
      %s215 = sphi 0, %s201
      %s219 = sphi 0, %s219
      %s221 = sphi 0, %s219
      %s222 = sphi 0, %s221
      %s236 = sphi 0, %s222
      %s240 = sphi 0, %s240
      %s242 = sphi 0, %s240
      %s243 = sphi 0, %s242
      %s257 = sphi 0, %s243
      %s265 = sphi 0, %s267
      %s268 = sphi 0, %s265
      %s269 = sphi 0, %s268
      %s285 = sphi 0, %s269
      %s293 = sphi 0, %s295
      %s296 = sphi 0, %s293
      %s297 = sphi 0, %s296
      %s313 = sphi 0, %s297
      %s321 = sphi 0, %s323
      %s324 = sphi 0, %s321
      %s325 = sphi 0, %s324
      %s341 = sphi 0, %s325
    $region4: #{tpu_custom_call.1} parent=1 // loop_header_branch
      %34 = sbr.rel (%p32) target = $region8
    $region5: #{tpu_custom_call.1} parent=1 // loop_body
      %s36 = ssub.s32 %s31, 1
      %s37 = ssub.s32 %s31, 2
      %s44 = sadd.s32 1, %s39
      %p45 = scmp.ge.s32.totalorder %s44, 1
      %s46 = scalar_select %p45, 0, %s44
      %s47 = sadd.s32 1, %s38
      %s48 = scalar_select %p45, %s47, %s38
      %p49 = scmp.ge.s32.totalorder %s48, 2
      %s50 = scalar_select %p49, 0, %s48
      %s51 = ssub.s32 %s38, %s50
      %s52 = ssub.s32 %s39, %s46
      %s53 = sor.u32 %s51, %s52
      %p54 = scmp.eq.s32.totalorder %s53, 0
      %s56 = sadd.s32 %s55, 1
      %s57 = scalar_select %p54, %s55, %s56
      %p60 = pneg %p54
      %p61 = scmp.eq.s32.totalorder %s31, 1
      %p62 = por %p60, %p61
      %p63 = scmp.ne.s32.totalorder %s55, %s58
      %p64 = scmp.eq.s32.totalorder %s31, 0
      %p65 = por %p63, %p64
      %p66 = scmp.ne.s32.totalorder %s55, %s58
      %p67 = scmp.eq.s32.totalorder %s36, 1
      %p68 = por %p66, %p67
      %p69 = scmp.ne.s32.totalorder %s58, %s59
      %p70 = scmp.eq.s32.totalorder %s36, 0
      %p71 = por %p69, %p70
      %p72 = scmp.ne.s32.totalorder %s58, %s59
      %p73 = scmp.eq.s32.totalorder %s37, 1
      %p74 = por %p72, %p73
      %p76 = scmp.ne.s32.totalorder %s59, %s75
      %p77 = scmp.eq.s32.totalorder %s37, 0
      %p78 = por %p76, %p77
      %s79 = ssub.s32 %s38, %s50
      %s80 = ssub.s32 %s39, %s46
      %s81 = sor.u32 %s79, %s80
      %p82 = scmp.eq.s32.totalorder %s81, 0
      %s84 = sadd.s32 %s83, 1
      %s85 = scalar_select %p82, %s83, %s84
      %p88 = pneg %p82
      %p89 = scmp.eq.s32.totalorder %s31, 1
      %p90 = por %p88, %p89
      %p91 = scmp.ne.s32.totalorder %s83, %s86
      %p92 = scmp.eq.s32.totalorder %s31, 0
      %p93 = por %p91, %p92
      %p94 = scmp.ne.s32.totalorder %s83, %s86
      %p95 = scmp.eq.s32.totalorder %s36, 1
      %p96 = por %p94, %p95
      %p97 = scmp.ne.s32.totalorder %s86, %s87
      %p98 = scmp.eq.s32.totalorder %s36, 0
      %p99 = por %p97, %p98
      %p100 = scmp.ne.s32.totalorder %s86, %s87
      %p101 = scmp.eq.s32.totalorder %s37, 1
      %p102 = por %p100, %p101
      %p104 = scmp.ne.s32.totalorder %s87, %s103
      %p105 = scmp.eq.s32.totalorder %s37, 0
      %p106 = por %p104, %p105
      %s107 = ssub.s32 %s38, %s50
      %s108 = ssub.s32 %s39, %s46
      %s109 = sor.u32 %s107, %s108
      %p110 = scmp.eq.s32.totalorder %s109, 0
      %s112 = sadd.s32 %s111, 1
      %s113 = scalar_select %p110, %s111, %s112
      %p116 = pneg %p110
      %p117 = scmp.eq.s32.totalorder %s31, 1
      %p118 = por %p116, %p117
      %p119 = scmp.ne.s32.totalorder %s111, %s114
      %p120 = scmp.eq.s32.totalorder %s31, 0
      %p121 = por %p119, %p120
      %p122 = scmp.ne.s32.totalorder %s111, %s114
      %p123 = scmp.eq.s32.totalorder %s36, 1
      %p124 = por %p122, %p123
      %p125 = scmp.ne.s32.totalorder %s114, %s115
      %p126 = scmp.eq.s32.totalorder %s36, 0
      %p127 = por %p125, %p126
      %p128 = scmp.ne.s32.totalorder %s114, %s115
      %p129 = scmp.eq.s32.totalorder %s37, 1
      %p130 = por %p128, %p129
      %p132 = scmp.ne.s32.totalorder %s115, %s131
      %p133 = scmp.eq.s32.totalorder %s37, 0
      %p134 = por %p132, %p133
      %s136 = sadd.s32 %s135, 1
      %p139 = scmp.eq.s32.totalorder %s31, 1
      %p140 = scmp.ne.s32.totalorder %s135, %s137
      %p141 = scmp.eq.s32.totalorder %s31, 0
      %p142 = por %p140, %p141
      %p143 = scmp.ne.s32.totalorder %s135, %s137
      %p144 = scmp.eq.s32.totalorder %s36, 1
      %p145 = por %p143, %p144
      %p146 = scmp.ne.s32.totalorder %s137, %s138
      %p147 = scmp.eq.s32.totalorder %s36, 0
      %p148 = por %p146, %p147
      %p149 = scmp.ne.s32.totalorder %s137, %s138
      %p150 = scmp.eq.s32.totalorder %s37, 1
      %p151 = por %p149, %p150
      %p153 = scmp.ne.s32.totalorder %s138, %s152
      %p154 = scmp.eq.s32.totalorder %s37, 0
      %p155 = por %p153, %p154
      %s157 = sadd.s32 %s156, 1
      %p160 = scmp.eq.s32.totalorder %s31, 1
      %p161 = scmp.ne.s32.totalorder %s156, %s158
      %p162 = scmp.eq.s32.totalorder %s31, 0
      %p163 = por %p161, %p162
      %p164 = scmp.ne.s32.totalorder %s156, %s158
      %p165 = scmp.eq.s32.totalorder %s36, 1
      %p166 = por %p164, %p165
      %p167 = scmp.ne.s32.totalorder %s158, %s159
      %p168 = scmp.eq.s32.totalorder %s36, 0
      %p169 = por %p167, %p168
      %p170 = scmp.ne.s32.totalorder %s158, %s159
      %p171 = scmp.eq.s32.totalorder %s37, 1
      %p172 = por %p170, %p171
      %p174 = scmp.ne.s32.totalorder %s159, %s173
      %p175 = scmp.eq.s32.totalorder %s37, 0
      %p176 = por %p174, %p175
      %s178 = sadd.s32 %s177, 1
      %p181 = scmp.eq.s32.totalorder %s31, 1
      %p182 = scmp.ne.s32.totalorder %s177, %s179
      %p183 = scmp.eq.s32.totalorder %s31, 0
      %p184 = por %p182, %p183
      %p185 = scmp.ne.s32.totalorder %s177, %s179
      %p186 = scmp.eq.s32.totalorder %s36, 1
      %p187 = por %p185, %p186
      %p188 = scmp.ne.s32.totalorder %s179, %s180
      %p189 = scmp.eq.s32.totalorder %s36, 0
      %p190 = por %p188, %p189
      %p191 = scmp.ne.s32.totalorder %s179, %s180
      %p192 = scmp.eq.s32.totalorder %s37, 1
      %p193 = por %p191, %p192
      %p195 = scmp.ne.s32.totalorder %s180, %s194
      %p196 = scmp.eq.s32.totalorder %s37, 0
      %p197 = por %p195, %p196
      %s199 = sadd.s32 %s198, 1
      %p202 = scmp.eq.s32.totalorder %s31, 1
      %p203 = scmp.ne.s32.totalorder %s198, %s200
      %p204 = scmp.eq.s32.totalorder %s31, 0
      %p205 = por %p203, %p204
      %p206 = scmp.ne.s32.totalorder %s198, %s200
      %p207 = scmp.eq.s32.totalorder %s36, 1
      %p208 = por %p206, %p207
      %p209 = scmp.ne.s32.totalorder %s200, %s201
      %p210 = scmp.eq.s32.totalorder %s36, 0
      %p211 = por %p209, %p210
      %p212 = scmp.ne.s32.totalorder %s200, %s201
      %p213 = scmp.eq.s32.totalorder %s37, 1
      %p214 = por %p212, %p213
      %p216 = scmp.ne.s32.totalorder %s201, %s215
      %p217 = scmp.eq.s32.totalorder %s37, 0
      %p218 = por %p216, %p217
      %s220 = sadd.s32 %s219, 1
      %p223 = scmp.eq.s32.totalorder %s31, 1
      %p224 = scmp.ne.s32.totalorder %s219, %s221
      %p225 = scmp.eq.s32.totalorder %s31, 0
      %p226 = por %p224, %p225
      %p227 = scmp.ne.s32.totalorder %s219, %s221
      %p228 = scmp.eq.s32.totalorder %s36, 1
      %p229 = por %p227, %p228
      %p230 = scmp.ne.s32.totalorder %s221, %s222
      %p231 = scmp.eq.s32.totalorder %s36, 0
      %p232 = por %p230, %p231
      %p233 = scmp.ne.s32.totalorder %s221, %s222
      %p234 = scmp.eq.s32.totalorder %s37, 1
      %p235 = por %p233, %p234
      %p237 = scmp.ne.s32.totalorder %s222, %s236
      %p238 = scmp.eq.s32.totalorder %s37, 0
      %p239 = por %p237, %p238
      %s241 = sadd.s32 %s240, 1
      %p244 = scmp.eq.s32.totalorder %s31, 1
      %p245 = scmp.ne.s32.totalorder %s240, %s242
      %p246 = scmp.eq.s32.totalorder %s31, 0
      %p247 = por %p245, %p246
      %p248 = scmp.ne.s32.totalorder %s240, %s242
      %p249 = scmp.eq.s32.totalorder %s36, 1
      %p250 = por %p248, %p249
      %p251 = scmp.ne.s32.totalorder %s242, %s243
      %p252 = scmp.eq.s32.totalorder %s36, 0
      %p253 = por %p251, %p252
      %p254 = scmp.ne.s32.totalorder %s242, %s243
      %p255 = scmp.eq.s32.totalorder %s37, 1
      %p256 = por %p254, %p255
      %p258 = scmp.ne.s32.totalorder %s243, %s257
      %p259 = scmp.eq.s32.totalorder %s37, 0
      %p260 = por %p258, %p259
      %s261 = ssub.s32 %s38, %s50
      %s262 = ssub.s32 %s39, %s46
      %s263 = sor.u32 %s261, %s262
      %p264 = scmp.eq.s32.totalorder %s263, 0
      %s266 = sadd.s32 %s265, 1
      %s267 = scalar_select %p264, %s265, %s266
      %p270 = pneg %p264
      %p271 = scmp.eq.s32.totalorder %s31, 1
      %p272 = por %p270, %p271
      %p273 = scmp.ne.s32.totalorder %s265, %s268
      %p274 = scmp.eq.s32.totalorder %s31, 0
      %p275 = por %p273, %p274
      %p276 = scmp.ne.s32.totalorder %s265, %s268
      %p277 = scmp.eq.s32.totalorder %s36, 1
      %p278 = por %p276, %p277
      %p279 = scmp.ne.s32.totalorder %s268, %s269
      %p280 = scmp.eq.s32.totalorder %s36, 0
      %p281 = por %p279, %p280
      %p282 = scmp.ne.s32.totalorder %s268, %s269
      %p283 = scmp.eq.s32.totalorder %s37, 1
      %p284 = por %p282, %p283
      %p286 = scmp.ne.s32.totalorder %s269, %s285
      %p287 = scmp.eq.s32.totalorder %s37, 0
      %p288 = por %p286, %p287
      %s289 = ssub.s32 %s38, %s50
      %s290 = ssub.s32 %s39, %s46
      %s291 = sor.u32 %s289, %s290
      %p292 = scmp.eq.s32.totalorder %s291, 0
      %s294 = sadd.s32 %s293, 1
      %s295 = scalar_select %p292, %s293, %s294
      %p298 = pneg %p292
      %p299 = scmp.eq.s32.totalorder %s31, 1
      %p300 = por %p298, %p299
      %p301 = scmp.ne.s32.totalorder %s293, %s296
      %p302 = scmp.eq.s32.totalorder %s31, 0
      %p303 = por %p301, %p302
      %p304 = scmp.ne.s32.totalorder %s293, %s296
      %p305 = scmp.eq.s32.totalorder %s36, 1
      %p306 = por %p304, %p305
      %p307 = scmp.ne.s32.totalorder %s296, %s297
      %p308 = scmp.eq.s32.totalorder %s36, 0
      %p309 = por %p307, %p308
      %p310 = scmp.ne.s32.totalorder %s296, %s297
      %p311 = scmp.eq.s32.totalorder %s37, 1
      %p312 = por %p310, %p311
      %p314 = scmp.ne.s32.totalorder %s297, %s313
      %p315 = scmp.eq.s32.totalorder %s37, 0
      %p316 = por %p314, %p315
      %s317 = ssub.s32 %s38, %s50
      %s318 = ssub.s32 %s39, %s46
      %s319 = sor.u32 %s317, %s318
      %p320 = scmp.eq.s32.totalorder %s319, 0
      %s322 = sadd.s32 %s321, 1
      %s323 = scalar_select %p320, %s321, %s322
      %p326 = pneg %p320
      %p327 = scmp.eq.s32.totalorder %s31, 1
      %p328 = por %p326, %p327
      %p329 = scmp.ne.s32.totalorder %s321, %s324
      %p330 = scmp.eq.s32.totalorder %s31, 0
      %p331 = por %p329, %p330
      %p332 = scmp.ne.s32.totalorder %s321, %s324
      %p333 = scmp.eq.s32.totalorder %s36, 1
      %p334 = por %p332, %p333
      %p335 = scmp.ne.s32.totalorder %s324, %s325
      %p336 = scmp.eq.s32.totalorder %s36, 0
      %p337 = por %p335, %p336
      %p338 = scmp.ne.s32.totalorder %s324, %s325
      %p339 = scmp.eq.s32.totalorder %s37, 1
      %p340 = por %p338, %p339
      %p342 = scmp.ne.s32.totalorder %s325, %s341
      %p343 = scmp.eq.s32.totalorder %s37, 0
      %p344 = por %p342, %p343
      %p345 = scmp.le.s32.totalorder 1, %s31
      %p346 = scmp.lt.s32.totalorder %s31, 3
      %p347 = pnand %p345, %p346
      %p348 = pneg %p347
      // Predicated region
      $region9: #{tpu_custom_call.1} parent=5 // pred_check
        _
      $region10: #{tpu_custom_call.1} parent=5 // pred_check_branch
        %350 = sbr.rel (%p347) target = $region12
      $region11: #{tpu_custom_call.1} parent=5 // pred_region
        %s351 = ssub.s32 %s31, 1
        // Predicated region
        $region13: #{tpu_custom_call.1} parent=11 // pred_check
          %p352 = pneg %p148
        $region14: #{tpu_custom_call.1} parent=11 // pred_check_branch
          %354 = sbr.rel (%p352) target = $region16
        $region15: #{tpu_custom_call.1} parent=11 // pred_region
          _
        $region16: #{tpu_custom_call.1} parent=11 // pred_fallthru
          _
        // Predicated region
        $region17: #{tpu_custom_call.1} parent=11 // pred_check
          %p355 = pneg %p169
        $region18: #{tpu_custom_call.1} parent=11 // pred_check_branch
          %357 = sbr.rel (%p355) target = $region20
        $region19: #{tpu_custom_call.1} parent=11 // pred_region
          _
        $region20: #{tpu_custom_call.1} parent=11 // pred_fallthru
          _
        // Predicated region
        $region21: #{tpu_custom_call.1} parent=11 // pred_check
          %p358 = pneg %p190
        $region22: #{tpu_custom_call.1} parent=11 // pred_check_branch
          %360 = sbr.rel (%p358) target = $region24
        $region23: #{tpu_custom_call.1} parent=11 // pred_region
          _
        $region24: #{tpu_custom_call.1} parent=11 // pred_fallthru
          _
        // Predicated region
        $region25: #{tpu_custom_call.1} parent=11 // pred_check
          %p361 = pneg %p211
        $region26: #{tpu_custom_call.1} parent=11 // pred_check_branch
          %363 = sbr.rel (%p361) target = $region28
        $region27: #{tpu_custom_call.1} parent=11 // pred_region
          _
        $region28: #{tpu_custom_call.1} parent=11 // pred_fallthru
          _
        // Predicated region
        $region29: #{tpu_custom_call.1} parent=11 // pred_check
          %p364 = pneg %p232
        $region30: #{tpu_custom_call.1} parent=11 // pred_check_branch
          %366 = sbr.rel (%p364) target = $region32
        $region31: #{tpu_custom_call.1} parent=11 // pred_region
          %s368 = ssub.s32 1024, 1024
          %369 = vsyncadd [#allocation9], %s368
          %s370 = sshll.u32 [#allocation8], 4
          %s371 = int_to_ptr.vmem [resolvable:$true] %s370
          %376 = dma.hbm_to_vmem [thread:$0]  %s7, 1024, %s371, [#allocation9], 128, 128, 8
        $region32: #{tpu_custom_call.1} parent=11 // pred_fallthru
          _
        // Predicated region
        $region33: #{tpu_custom_call.1} parent=11 // pred_check
          %p377 = pneg %p253
        $region34: #{tpu_custom_call.1} parent=11 // pred_check_branch
          %379 = sbr.rel (%p377) target = $region36
        $region35: #{tpu_custom_call.1} parent=11 // pred_region
          _
        $region36: #{tpu_custom_call.1} parent=11 // pred_fallthru
          _
      $region12: #{tpu_custom_call.1} parent=5 // pred_fallthru
        _
      %p380 = scmp.lt.s32.totalorder %s31, 2
      // Predicated region
      $region37: #{tpu_custom_call.1} parent=5 // pred_check
        %p381 = pneg %p380
      $region38: #{tpu_custom_call.1} parent=5 // pred_check_branch
        %383 = sbr.rel (%p381) target = $region40
      $region39: #{tpu_custom_call.1} parent=5 // pred_region
        // Predicated region
        $region41: #{tpu_custom_call.1} parent=39 // pred_check
          %p384 = pneg %p65
        $region42: #{tpu_custom_call.1} parent=39 // pred_check_branch
          %386 = sbr.rel (%p384) target = $region44
        $region43: #{tpu_custom_call.1} parent=39 // pred_region
          %s387 = sand.u32 %s55, 1
          %s388 = scalar_lea.sflag [#allocation3], %s387
          %s389 = sand.u32 %s55, 1
          %s390 = smul.addr %s389, 64
          %s391 = scalar_lea.vmem [#allocation2], %s390
          %s393 = ssub.s32 1024, 1024
          %394 = vsyncadd %s388, %s393
          %s395 = smul.addr %s38, 8
          %s396 = sadd.s32 %s39, %s395
          %s397 = smul.addr %s396, 128
          %s398 = scalar_lea.hbm %s0, %s397
          %s399 = sshll.u32 %s391, 4
          %s400 = int_to_ptr.vmem [resolvable:$true] %s399
          %405 = dma.hbm_to_vmem [thread:$0]  %s398, 1024, %s400, %s388, 128, 128, 8
        $region44: #{tpu_custom_call.1} parent=39 // pred_fallthru
          _
        // Predicated region
        $region45: #{tpu_custom_call.1} parent=39 // pred_check
          %p406 = pneg %p93
        $region46: #{tpu_custom_call.1} parent=39 // pred_check_branch
          %408 = sbr.rel (%p406) target = $region48
        $region47: #{tpu_custom_call.1} parent=39 // pred_region
          %s409 = sand.u32 %s31, 1
          %s410 = scalar_lea.sflag [#allocation6], %s409
          %s411 = sand.u32 %s83, 1
          %s412 = smul.addr %s411, 64
          %s413 = scalar_lea.vmem [#allocation5], %s412
          %s415 = ssub.s32 1024, 1024
          %416 = vsyncadd %s410, %s415
          %s417 = smul.addr %s38, 8
          %s418 = sadd.s32 %s39, %s417
          %s419 = smul.addr %s418, 128
          %s420 = scalar_lea.hbm %s1, %s419
          %s421 = sshll.u32 %s413, 4
          %s422 = int_to_ptr.vmem [resolvable:$true] %s421
          %427 = dma.hbm_to_vmem [thread:$0]  %s420, 1024, %s422, %s410, 128, 128, 8
        $region48: #{tpu_custom_call.1} parent=39 // pred_fallthru
          _
        // Predicated region
        $region49: #{tpu_custom_call.1} parent=39 // pred_check
          %p428 = pneg %p121
        $region50: #{tpu_custom_call.1} parent=39 // pred_check_branch
          %430 = sbr.rel (%p428) target = $region52
        $region51: #{tpu_custom_call.1} parent=39 // pred_region
          %s431 = sand.u32 %s31, 1
          %s432 = scalar_lea.sflag [#allocation6], %s431
          %s433 = sand.u32 %s111, 1
          %s434 = smul.addr %s433, 64
          %s435 = scalar_lea.vmem [#allocation7], %s434
          %s437 = ssub.s32 1024, 1024
          %438 = vsyncadd %s432, %s437
          %s439 = smul.addr %s38, 8
          %s440 = sadd.s32 %s39, %s439
          %s441 = smul.addr %s440, 128
          %s442 = scalar_lea.hbm %s2, %s441
          %s443 = sshll.u32 %s435, 4
          %s444 = int_to_ptr.vmem [resolvable:$true] %s443
          %449 = dma.hbm_to_vmem [thread:$0]  %s442, 1024, %s444, %s432, 128, 128, 8
        $region52: #{tpu_custom_call.1} parent=39 // pred_fallthru
          _
      $region40: #{tpu_custom_call.1} parent=5 // pred_fallthru
        _
      %p450 = scmp.le.s32.totalorder 1, %s31
      %p451 = scmp.lt.s32.totalorder %s31, 3
      %p452 = pnand %p450, %p451
      %p453 = pneg %p452
      // Predicated region
      $region53: #{tpu_custom_call.1} parent=5 // pred_check
        _
      $region54: #{tpu_custom_call.1} parent=5 // pred_check_branch
        %455 = sbr.rel (%p452) target = $region56
      $region55: #{tpu_custom_call.1} parent=5 // pred_region
        %s456 = ssub.s32 %s31, 1
        %s457 = sand.u32 %s58, 1
        %s458 = scalar_lea.sflag [#allocation3], %s457
        %s459 = sand.u32 %s58, 1
        %s460 = smul.addr %s459, 64
        %s461 = scalar_lea.vmem [#allocation2], %s460
        // Predicated region
        $region57: #{tpu_custom_call.1} parent=55 // pred_check
          %p462 = pneg %p71
        $region58: #{tpu_custom_call.1} parent=55 // pred_check_branch
          %464 = sbr.rel (%p462) target = $region60
        $region59: #{tpu_custom_call.1} parent=55 // pred_region
          %465 = dma.done %s458, 1024
        $region60: #{tpu_custom_call.1} parent=55 // pred_fallthru
          _
        %s466 = sand.u32 %s36, 1
        %s467 = scalar_lea.sflag [#allocation6], %s466
        %s468 = sand.u32 %s86, 1
        %s469 = smul.addr %s468, 64
        %s470 = scalar_lea.vmem [#allocation5], %s469
        // Predicated region
        $region61: #{tpu_custom_call.1} parent=55 // pred_check
          %p471 = pneg %p99
        $region62: #{tpu_custom_call.1} parent=55 // pred_check_branch
          %473 = sbr.rel (%p471) target = $region64
        $region63: #{tpu_custom_call.1} parent=55 // pred_region
          %474 = dma.done %s467, 1024
        $region64: #{tpu_custom_call.1} parent=55 // pred_fallthru
          _
        %s475 = sand.u32 %s36, 1
        %s476 = scalar_lea.sflag [#allocation6], %s475
        %s477 = sand.u32 %s114, 1
        %s478 = smul.addr %s477, 64
        %s479 = scalar_lea.vmem [#allocation7], %s478
        // Predicated region
        $region65: #{tpu_custom_call.1} parent=55 // pred_check
          %p480 = pneg %p127
        $region66: #{tpu_custom_call.1} parent=55 // pred_check_branch
          %482 = sbr.rel (%p480) target = $region68
        $region67: #{tpu_custom_call.1} parent=55 // pred_region
          %483 = dma.done %s476, 1024
        $region68: #{tpu_custom_call.1} parent=55 // pred_fallthru
          _
        // Predicated region
        $region69: #{tpu_custom_call.1} parent=55 // pred_check
          %p484 = pneg %p232
        $region70: #{tpu_custom_call.1} parent=55 // pred_check_branch
          %486 = sbr.rel (%p484) target = $region72
        $region71: #{tpu_custom_call.1} parent=55 // pred_region
          %487 = dma.done [#allocation9], 1024
        $region72: #{tpu_custom_call.1} parent=55 // pred_fallthru
          _
        %s488 = sand.u32 %s58, 1
        %s489 = scalar_lea.sflag [#allocation3], %s488
        %s490 = sand.u32 %s58, 1
        %s491 = smul.addr %s490, 64
        %s492 = scalar_lea.vmem [#allocation2], %s491
        %p493 = pneg %p71
        %p494 = pneg %p68
        %s495 = sand.u32 %s36, 1
        %s496 = scalar_lea.sflag [#allocation6], %s495
        %s497 = sand.u32 %s86, 1
        %s498 = smul.addr %s497, 64
        %s499 = scalar_lea.vmem [#allocation5], %s498
        %p500 = pneg %p99
        %p501 = pneg %p96
        %s502 = sand.u32 %s36, 1
        %s503 = scalar_lea.sflag [#allocation6], %s502
        %s504 = sand.u32 %s114, 1
        %s505 = smul.addr %s504, 64
        %s506 = scalar_lea.vmem [#allocation7], %s505
        %p507 = pneg %p127
        %p508 = pneg %p124
        %p509 = pneg %p148
        %p510 = pneg %p145
        %p511 = pneg %p169
        %p512 = pneg %p166
        %p513 = pneg %p190
        %p514 = pneg %p187
        %p515 = pneg %p211
        %p516 = pneg %p208
        %p517 = pneg %p232
        %p518 = pneg %p229
        %p519 = pneg %p253
        %p520 = pneg %p250
        %p521 = pneg %p281
        %p522 = pneg %p278
        %s523 = sand.u32 %s268, 1
        %s524 = scalar_lea.sflag [#allocation4], %s523
        %s525 = sand.u32 %s268, 1
        %s526 = scalar_lea.vmem [#allocation10], %s525
        %p527 = pneg %p309
        %p528 = pneg %p306
        %s529 = sand.u32 %s296, 1
        %s530 = scalar_lea.sflag [#allocation12], %s529
        %s531 = sand.u32 %s296, 1
        %s532 = scalar_lea.vmem [#allocation11], %s531
        %p533 = pneg %p337
        %p534 = pneg %p334
        %s535 = smul.u32 16, %s41
        %p536 = scmp.lt.s32.totalorder %s40, 1
        %s537 = scalar_select %p536, %s40, 1
        %p538 = scmp.lt.s32.totalorder %s535, 15
        %s539 = scalar_select %p538, %s535, 15
        %s540 = smul.addr %s537, 16
        %s541 = sadd.s32 %s539, %s540
        %s542 = smul.addr %s541, 4
        %s543 = scalar_lea.vmem %s11, %s542
        %s544 = smul.u32 16, %s41
        %p545 = scmp.lt.s32.totalorder %s40, 1
        %s546 = scalar_select %p545, %s40, 1
        %p547 = scmp.lt.s32.totalorder %s544, 15
        %s548 = scalar_select %p547, %s544, 15
        %s549 = smul.addr %s546, 16
        %s550 = sadd.s32 %s548, %s549
        %s551 = smul.addr %s550, 4
        %s552 = scalar_lea.vmem %s11, %s551
        %s553 = smul.u32 16, %s41
        %v554 = vld [vmem:[%s3] sm:$0x3]
        %v555 = vld [vmem:[%s461] sm:$0xff]
        %v556 = vld [vmem:[%s461 + $0x8] sm:$0xff]
        %v557 = vld [vmem:[%s461 + $0x10] sm:$0xff]
        %v558 = vld [vmem:[%s461 + $0x18] sm:$0xff]
        %v559 = vld [vmem:[%s461 + $0x20] sm:$0xff]
        %v560 = vld [vmem:[%s461 + $0x28] sm:$0xff]
        %v561 = vld [vmem:[%s461 + $0x30] sm:$0xff]
        %v562 = vld [vmem:[%s461 + $0x38] sm:$0xff]
        %v563 = vld [vmem:[%s4] sm:$0x3]
        %565 = vset.pattern.permute.xlu0 0
        %566 = vperm.xlu0 %565, %v563
        %v567 = vpop.permute.xlu0 %566
        %vm569 = vcmask 523264
        %v571 = vsel %vm569, %v554, 0
        %573 = vmatprep.subr.mxu0 0.0
        %574 = vmatpush1.msra.mxu0 %v555
        %575 = vmatprep.subr.mxu0 0.0
        %576 = vmatpush1.msra.mxu0 %v556
        %577 = vmatprep.subr.mxu0 0.0
        %578 = vmatpush1.msra.mxu0 %v557
        %579 = vmatprep.subr.mxu0 0.0
        %580 = vmatpush1.msra.mxu0 %v558
        %581 = vmatprep.subr.mxu0 0.0
        %582 = vmatpush1.msra.mxu0 %v559
        %583 = vmatprep.subr.mxu0 0.0
        %584 = vmatpush1.msra.mxu0 %v560
        %585 = vmatprep.subr.mxu0 0.0
        %586 = vmatpush1.msra.mxu0 %v561
        %587 = vmatprep.subr.mxu0 0.0
        %588 = vmatpush1.msra.mxu0 %v562
        %589 = vmatprep.subr.mxu0 0.0
        %590 = vmatpush1.msra.mxu0 0.0
        %591 = vmatprep.subr.mxu0 0.0
        %592 = vmatpush1.msra.mxu0 0.0
        %593 = vmatprep.subr.mxu0 0.0
        %594 = vmatpush1.msra.mxu0 0.0
        %595 = vmatprep.subr.mxu0 0.0
        %596 = vmatpush1.msra.mxu0 0.0
        %597 = vmatprep.subr.mxu0 0.0
        %598 = vmatpush1.msra.mxu0 0.0
        %599 = vmatprep.subr.mxu0 0.0
        %600 = vmatpush1.msra.mxu0 0.0
        %601 = vmatprep.subr.mxu0 0.0
        %602 = vmatpush1.msra.mxu0 0.0
        %603 = vmatprep.subr.mxu0 0.0
        %604 = vmatpush1.msra.mxu0 0.0
        %605 = vmatprep.subr.mxu0 0.0
        %606 = vmatpush1.msra.mxu0 0.0
        %607 = vmatprep.subr.mxu0 0.0
        %608 = vmatpush1.msra.mxu0 0.0
        %609 = vmatprep.subr.mxu0 0.0
        %610 = vmatpush1.msra.mxu0 0.0
        %611 = vmatprep.subr.mxu0 0.0
        %612 = vmatpush1.msra.mxu0 0.0
        %613 = vmatprep.subr.mxu0 0.0
        %614 = vmatpush1.msra.mxu0 0.0
        %615 = vmatprep.subr.mxu0 0.0
        %616 = vmatpush1.msra.mxu0 0.0
        %617 = vmatprep.subr.mxu0 0.0
        %618 = vmatpush1.msra.mxu0 0.0
        %619 = vmatprep.subr.mxu0 0.0
        %620 = vmatpush1.msra.mxu0 0.0
        %621 = vmatprep.subr.mxu0 0.0
        %622 = vmatpush1.msra.mxu0 0.0
        %623 = vmatprep.subr.mxu0 0.0
        %624 = vmatpush1.msra.mxu0 0.0
        %625 = vmatprep.subr.mxu0 0.0
        %626 = vmatpush1.msra.mxu0 0.0
        %627 = vmatprep.subr.mxu0 0.0
        %628 = vmatpush1.msra.mxu0 0.0
        %629 = vmatprep.subr.mxu0 0.0
        %630 = vmatpush1.msra.mxu0 0.0
        %631 = vmatprep.subr.mxu0 0.0
        %632 = vmatpush1.msra.mxu0 0.0
        %633 = vmatprep.subr.mxu0 0.0
        %634 = vmatpush1.msra.mxu0 0.0
        %635 = vmatprep.subr.mxu0 0.0
        %636 = vmatpush1.msra.mxu0 0.0
        %637 = vmatprep.mubr.f32.mxu0 0.0
        %638 = vmatmul.mubr.f32.gmra.mrb[0].mxu0 %v571
        %v639 = vpop.f32.mrb[0].mxu0
        %v640 = vadd.f32 %v567, %v639
        %v641 = vpop.f32.mrb[0].mxu0
        %642 = vdwg.mxu0
        %v643 = vmul.f32 %v640, 0.044194173
        %v644 = vpack.c.bf16 %v643, %v643
        %645 = vst [vmem:[%s526] sm:$0x1] %v644
        %v646 = vld [vmem:[%s5] sm:$0x3]
        %v647 = vld [vmem:[%s470] sm:$0xff]
        %v648 = vld [vmem:[%s470 + $0x8] sm:$0xff]
        %v649 = vld [vmem:[%s470 + $0x10] sm:$0xff]
        %v650 = vld [vmem:[%s470 + $0x18] sm:$0xff]
        %v651 = vld [vmem:[%s470 + $0x20] sm:$0xff]
        %v652 = vld [vmem:[%s470 + $0x28] sm:$0xff]
        %v653 = vld [vmem:[%s470 + $0x30] sm:$0xff]
        %v654 = vld [vmem:[%s470 + $0x38] sm:$0xff]
        %v655 = vld [vmem:[%s6] sm:$0x3]
        %657 = vset.pattern.permute.xlu0 0
        %658 = vperm.xlu0 %657, %v655
        %v659 = vpop.permute.xlu0 %658
        %v662 = vsel %vm569, %v646, 0
        %664 = vmatprep.subr.mxu0 0.0
        %665 = vmatpush1.msra.mxu0 %v647
        %666 = vmatprep.subr.mxu0 0.0
        %667 = vmatpush1.msra.mxu0 %v648
        %668 = vmatprep.subr.mxu0 0.0
        %669 = vmatpush1.msra.mxu0 %v649
        %670 = vmatprep.subr.mxu0 0.0
        %671 = vmatpush1.msra.mxu0 %v650
        %672 = vmatprep.subr.mxu0 0.0
        %673 = vmatpush1.msra.mxu0 %v651
        %674 = vmatprep.subr.mxu0 0.0
        %675 = vmatpush1.msra.mxu0 %v652
        %676 = vmatprep.subr.mxu0 0.0
        %677 = vmatpush1.msra.mxu0 %v653
        %678 = vmatprep.subr.mxu0 0.0
        %679 = vmatpush1.msra.mxu0 %v654
        %680 = vmatprep.subr.mxu0 0.0
        %681 = vmatpush1.msra.mxu0 0.0
        %682 = vmatprep.subr.mxu0 0.0
        %683 = vmatpush1.msra.mxu0 0.0
        %684 = vmatprep.subr.mxu0 0.0
        %685 = vmatpush1.msra.mxu0 0.0
        %686 = vmatprep.subr.mxu0 0.0
        %687 = vmatpush1.msra.mxu0 0.0
        %688 = vmatprep.subr.mxu0 0.0
        %689 = vmatpush1.msra.mxu0 0.0
        %690 = vmatprep.subr.mxu0 0.0
        %691 = vmatpush1.msra.mxu0 0.0
        %692 = vmatprep.subr.mxu0 0.0
        %693 = vmatpush1.msra.mxu0 0.0
        %694 = vmatprep.subr.mxu0 0.0
        %695 = vmatpush1.msra.mxu0 0.0
        %696 = vmatprep.subr.mxu0 0.0
        %697 = vmatpush1.msra.mxu0 0.0
        %698 = vmatprep.subr.mxu0 0.0
        %699 = vmatpush1.msra.mxu0 0.0
        %700 = vmatprep.subr.mxu0 0.0
        %701 = vmatpush1.msra.mxu0 0.0
        %702 = vmatprep.subr.mxu0 0.0
        %703 = vmatpush1.msra.mxu0 0.0
        %704 = vmatprep.subr.mxu0 0.0
        %705 = vmatpush1.msra.mxu0 0.0
        %706 = vmatprep.subr.mxu0 0.0
        %707 = vmatpush1.msra.mxu0 0.0
        %708 = vmatprep.subr.mxu0 0.0
        %709 = vmatpush1.msra.mxu0 0.0
        %710 = vmatprep.subr.mxu0 0.0
        %711 = vmatpush1.msra.mxu0 0.0
        %712 = vmatprep.subr.mxu0 0.0
        %713 = vmatpush1.msra.mxu0 0.0
        %714 = vmatprep.subr.mxu0 0.0
        %715 = vmatpush1.msra.mxu0 0.0
        %716 = vmatprep.subr.mxu0 0.0
        %717 = vmatpush1.msra.mxu0 0.0
        %718 = vmatprep.subr.mxu0 0.0
        %719 = vmatpush1.msra.mxu0 0.0
        %720 = vmatprep.subr.mxu0 0.0
        %721 = vmatpush1.msra.mxu0 0.0
        %722 = vmatprep.subr.mxu0 0.0
        %723 = vmatpush1.msra.mxu0 0.0
        %724 = vmatprep.subr.mxu0 0.0
        %725 = vmatpush1.msra.mxu0 0.0
        %726 = vmatprep.subr.mxu0 0.0
        %727 = vmatpush1.msra.mxu0 0.0
        %728 = vmatprep.mubr.f32.mxu0 0.0
        %729 = vmatmul.mubr.f32.gmra.mrb[0].mxu0 %v662
        %v730 = vpop.f32.mrb[0].mxu0
        %v731 = vadd.f32 %v659, %v730
        %v732 = vpop.f32.mrb[0].mxu0
        %733 = vdwg.mxu0
        %v734 = vpack.c.bf16 %v731, %v731
        %735 = vst [vmem:[%s532] sm:$0x1] %v734
        %v736 = vld [vmem:[%s479] sm:$0xff]
        %v737 = vld [vmem:[%s479 + $0x8] sm:$0xff]
        %v738 = vld [vmem:[%s479 + $0x10] sm:$0xff]
        %v739 = vld [vmem:[%s479 + $0x18] sm:$0xff]
        %v740 = vld [vmem:[%s479 + $0x20] sm:$0xff]
        %v741 = vld [vmem:[%s479 + $0x28] sm:$0xff]
        %v742 = vld [vmem:[%s479 + $0x30] sm:$0xff]
        %v743 = vld [vmem:[%s479 + $0x38] sm:$0xff]
        %v744 = vld [vmem:[#allocation8] sm:$0xff]
        %v745 = vld [vmem:[#allocation8 + $0x8] sm:$0xff]
        %v746 = vld [vmem:[#allocation8 + $0x10] sm:$0xff]
        %v747 = vld [vmem:[#allocation8 + $0x18] sm:$0xff]
        %v748 = vld [vmem:[#allocation8 + $0x20] sm:$0xff]
        %v749 = vld [vmem:[#allocation8 + $0x28] sm:$0xff]
        %v750 = vld [vmem:[#allocation8 + $0x30] sm:$0xff]
        %v751 = vld [vmem:[#allocation8 + $0x38] sm:$0xff]
        %v752 = vld [vmem:[%s8] sm:$0x1]
        %v754 = vlaneseq
        %v755 = vshrl.u32 %v754, 7
        %v756 = vsub.s32 0, %v755
        %v757 = vrot.slane %v752, %v756
        %759 = vxpose.xlu0.b32.start [1/16] %v736, 128
        %760 = vxpose.xlu0.b32.cont [2/16] %v737, 128
        %761 = vxpose.xlu0.b32.cont [3/16] %v738, 128
        %762 = vxpose.xlu0.b32.cont [4/16] %v739, 128
        %763 = vxpose.xlu0.b32.cont [5/16] %v740, 128
        %764 = vxpose.xlu0.b32.cont [6/16] %v741, 128
        %765 = vxpose.xlu0.b32.cont [7/16] %v742, 128
        %766 = vxpose.xlu0.b32.cont [8/16] %v743, 128
        %767 = vxpose.xlu0.b32.cont [9/16] 0.0, 128
        %768 = vxpose.xlu0.b32.cont [10/16] 0.0, 128
        %769 = vxpose.xlu0.b32.cont [11/16] 0.0, 128
        %770 = vxpose.xlu0.b32.cont [12/16] 0.0, 128
        %771 = vxpose.xlu0.b32.cont [13/16] 0.0, 128
        %772 = vxpose.xlu0.b32.cont [14/16] 0.0, 128
        %773 = vxpose.xlu0.b32.cont [15/16] 0.0, 128
        %774 = vxpose.xlu0.b32.end [16/16] 0.0, 128
        %v775 = vpop.trf.xlu0
        %v776 = vpop.trf.xlu0
        %v777 = vpop.trf.xlu0
        %v778 = vpop.trf.xlu0
        %v779 = vpop.trf.xlu0
        %v780 = vpop.trf.xlu0
        %v781 = vpop.trf.xlu0
        %v782 = vpop.trf.xlu0
        %v783 = vpop.trf.xlu0
        %v784 = vpop.trf.xlu0
        %v785 = vpop.trf.xlu0
        %v786 = vpop.trf.xlu0
        %v787 = vpop.trf.xlu0
        %v788 = vpop.trf.xlu0
        %v789 = vpop.trf.xlu0
        %v790 = vpop.trf.xlu0
        %v792 = vsel %vm569, %v775, 0
        %v795 = vsel %vm569, %v776, 0
        %v798 = vsel %vm569, %v777, 0
        %v801 = vsel %vm569, %v778, 0
        %v804 = vsel %vm569, %v779, 0
        %v807 = vsel %vm569, %v780, 0
        %v810 = vsel %vm569, %v781, 0
        %v813 = vsel %vm569, %v782, 0
        %v816 = vsel %vm569, %v783, 0
        %v819 = vsel %vm569, %v784, 0
        %v822 = vsel %vm569, %v785, 0
        %v825 = vsel %vm569, %v786, 0
        %v828 = vsel %vm569, %v787, 0
        %v831 = vsel %vm569, %v788, 0
        %v834 = vsel %vm569, %v789, 0
        %v837 = vsel %vm569, %v790, 0
        %v840 = vsel %vm569, %v744, 0
        %v843 = vsel %vm569, %v745, 0
        %v846 = vsel %vm569, %v746, 0
        %v849 = vsel %vm569, %v747, 0
        %v852 = vsel %vm569, %v748, 0
        %v855 = vsel %vm569, %v749, 0
        %v858 = vsel %vm569, %v750, 0
        %v861 = vsel %vm569, %v751, 0
        %863 = vmatprep.subr.mxu0 0.0
        %864 = vmatpush1.xpose.msra.mxu0 %v840
        %865 = vmatprep.subr.mxu0 0.0
        %866 = vmatpush1.xpose.msra.mxu0 %v843
        %867 = vmatprep.subr.mxu0 0.0
        %868 = vmatpush1.xpose.msra.mxu0 %v846
        %869 = vmatprep.subr.mxu0 0.0
        %870 = vmatpush1.xpose.msra.mxu0 %v849
        %871 = vmatprep.subr.mxu0 0.0
        %872 = vmatpush1.xpose.msra.mxu0 %v852
        %873 = vmatprep.subr.mxu0 0.0
        %874 = vmatpush1.xpose.msra.mxu0 %v855
        %875 = vmatprep.subr.mxu0 0.0
        %876 = vmatpush1.xpose.msra.mxu0 %v858
        %877 = vmatprep.subr.mxu0 0.0
        %878 = vmatpush1.xpose.msra.mxu0 %v861
        %879 = vmatprep.subr.mxu0 0.0
        %880 = vmatpush1.xpose.msra.mxu0 0.0
        %881 = vmatprep.subr.mxu0 0.0
        %882 = vmatpush1.xpose.msra.mxu0 0.0
        %883 = vmatprep.subr.mxu0 0.0
        %884 = vmatpush1.xpose.msra.mxu0 0.0
        %885 = vmatprep.subr.mxu0 0.0
        %886 = vmatpush1.xpose.msra.mxu0 0.0
        %887 = vmatprep.subr.mxu0 0.0
        %888 = vmatpush1.xpose.msra.mxu0 0.0
        %889 = vmatprep.subr.mxu0 0.0
        %890 = vmatpush1.xpose.msra.mxu0 0.0
        %891 = vmatprep.subr.mxu0 0.0
        %892 = vmatpush1.xpose.msra.mxu0 0.0
        %893 = vmatprep.subr.mxu0 0.0
        %894 = vmatpush1.xpose.msra.mxu0 0.0
        %895 = vmatprep.subr.mxu0 0.0
        %896 = vmatpush1.xpose.msra.mxu0 0.0
        %897 = vmatprep.subr.mxu0 0.0
        %898 = vmatpush1.xpose.msra.mxu0 0.0
        %899 = vmatprep.subr.mxu0 0.0
        %900 = vmatpush1.xpose.msra.mxu0 0.0
        %901 = vmatprep.subr.mxu0 0.0
        %902 = vmatpush1.xpose.msra.mxu0 0.0
        %903 = vmatprep.subr.mxu0 0.0
        %904 = vmatpush1.xpose.msra.mxu0 0.0
        %905 = vmatprep.subr.mxu0 0.0
        %906 = vmatpush1.xpose.msra.mxu0 0.0
        %907 = vmatprep.subr.mxu0 0.0
        %908 = vmatpush1.xpose.msra.mxu0 0.0
        %909 = vmatprep.subr.mxu0 0.0
        %910 = vmatpush1.xpose.msra.mxu0 0.0
        %911 = vmatprep.subr.mxu0 0.0
        %912 = vmatpush1.xpose.msra.mxu0 0.0
        %913 = vmatprep.subr.mxu0 0.0
        %914 = vmatpush1.xpose.msra.mxu0 0.0
        %915 = vmatprep.subr.mxu0 0.0
        %916 = vmatpush1.xpose.msra.mxu0 0.0
        %917 = vmatprep.subr.mxu0 0.0
        %918 = vmatpush1.xpose.msra.mxu0 0.0
        %919 = vmatprep.subr.mxu0 0.0
        %920 = vmatpush1.xpose.msra.mxu0 0.0
        %921 = vmatprep.subr.mxu0 0.0
        %922 = vmatpush1.xpose.msra.mxu0 0.0
        %923 = vmatprep.subr.mxu0 0.0
        %924 = vmatpush1.xpose.msra.mxu0 0.0
        %925 = vmatprep.subr.mxu0 0.0
        %926 = vmatpush1.xpose.msra.mxu0 0.0
        %927 = vmatprep.mubr.f32.mxu0 0.0
        %928 = vmatmul.mubr.f32.gmra.mrb[0].mxu0 %v792
        %v929 = vpop.f32.mrb[0].mxu0
        %v930 = vadd.f32 %v757, %v929
        %v931 = vpop.f32.mrb[0].mxu0
        %932 = vmatprep.mubr.f32.mxu0 0.0
        %933 = vmatmul.mubr.f32.gmra.mrb[0].mxu0 %v795
        %v934 = vpop.f32.mrb[0].mxu0
        %v935 = vadd.f32 %v757, %v934
        %v936 = vpop.f32.mrb[0].mxu0
        %937 = vmatprep.mubr.f32.mxu0 0.0
        %938 = vmatmul.mubr.f32.gmra.mrb[0].mxu0 %v798
        %v939 = vpop.f32.mrb[0].mxu0
        %v940 = vadd.f32 %v757, %v939
        %v941 = vpop.f32.mrb[0].mxu0
        %942 = vmatprep.mubr.f32.mxu0 0.0
        %943 = vmatmul.mubr.f32.gmra.mrb[0].mxu0 %v801
        %v944 = vpop.f32.mrb[0].mxu0
        %v945 = vadd.f32 %v757, %v944
        %v946 = vpop.f32.mrb[0].mxu0
        %947 = vmatprep.mubr.f32.mxu0 0.0
        %948 = vmatmul.mubr.f32.gmra.mrb[0].mxu0 %v804
        %v949 = vpop.f32.mrb[0].mxu0
        %v950 = vadd.f32 %v757, %v949
        %v951 = vpop.f32.mrb[0].mxu0
        %952 = vmatprep.mubr.f32.mxu0 0.0
        %953 = vmatmul.mubr.f32.gmra.mrb[0].mxu0 %v807
        %v954 = vpop.f32.mrb[0].mxu0
        %v955 = vadd.f32 %v757, %v954
        %v956 = vpop.f32.mrb[0].mxu0
        %957 = vmatprep.mubr.f32.mxu0 0.0
        %958 = vmatmul.mubr.f32.gmra.mrb[0].mxu0 %v810
        %v959 = vpop.f32.mrb[0].mxu0
        %v960 = vadd.f32 %v757, %v959
        %v961 = vpop.f32.mrb[0].mxu0
        %962 = vmatprep.mubr.f32.mxu0 0.0
        %963 = vmatmul.mubr.f32.gmra.mrb[0].mxu0 %v813
        %v964 = vpop.f32.mrb[0].mxu0
        %v965 = vadd.f32 %v757, %v964
        %v966 = vpop.f32.mrb[0].mxu0
        %967 = vmatprep.mubr.f32.mxu0 0.0
        %968 = vmatmul.mubr.f32.gmra.mrb[0].mxu0 %v816
        %v969 = vpop.f32.mrb[0].mxu0
        %v970 = vadd.f32 %v757, %v969
        %v971 = vpop.f32.mrb[0].mxu0
        %972 = vmatprep.mubr.f32.mxu0 0.0
        %973 = vmatmul.mubr.f32.gmra.mrb[0].mxu0 %v819
        %v974 = vpop.f32.mrb[0].mxu0
        %v975 = vadd.f32 %v757, %v974
        %v976 = vpop.f32.mrb[0].mxu0
        %977 = vmatprep.mubr.f32.mxu0 0.0
        %978 = vmatmul.mubr.f32.gmra.mrb[0].mxu0 %v822
        %v979 = vpop.f32.mrb[0].mxu0
        %v980 = vadd.f32 %v757, %v979
        %v981 = vpop.f32.mrb[0].mxu0
        %982 = vmatprep.mubr.f32.mxu0 0.0
        %983 = vmatmul.mubr.f32.gmra.mrb[0].mxu0 %v825
        %v984 = vpop.f32.mrb[0].mxu0
        %v985 = vadd.f32 %v757, %v984
        %v986 = vpop.f32.mrb[0].mxu0
        %987 = vmatprep.mubr.f32.mxu0 0.0
        %988 = vmatmul.mubr.f32.gmra.mrb[0].mxu0 %v828
        %v989 = vpop.f32.mrb[0].mxu0
        %v990 = vadd.f32 %v757, %v989
        %v991 = vpop.f32.mrb[0].mxu0
        %992 = vmatprep.mubr.f32.mxu0 0.0
        %993 = vmatmul.mubr.f32.gmra.mrb[0].mxu0 %v831
        %v994 = vpop.f32.mrb[0].mxu0
        %v995 = vadd.f32 %v757, %v994
        %v996 = vpop.f32.mrb[0].mxu0
        %997 = vmatprep.mubr.f32.mxu0 0.0
        %998 = vmatmul.mubr.f32.gmra.mrb[0].mxu0 %v834
        %v999 = vpop.f32.mrb[0].mxu0
        %v1000 = vadd.f32 %v757, %v999
        %v1001 = vpop.f32.mrb[0].mxu0
        %1002 = vmatprep.mubr.f32.mxu0 0.0
        %1003 = vmatmul.mubr.f32.gmra.mrb[0].mxu0 %v837
        %v1004 = vpop.f32.mrb[0].mxu0
        %v1005 = vadd.f32 %v757, %v1004
        %v1006 = vpop.f32.mrb[0].mxu0
        %1007 = vdwg.mxu0
        %v1008 = vpack.c.bf16 %v935, %v930
        %v1009 = vpack.c.bf16 %v945, %v940
        %v1010 = vpack.c.bf16 %v955, %v950
        %v1011 = vpack.c.bf16 %v965, %v960
        %v1012 = vpack.c.bf16 %v975, %v970
        %v1013 = vpack.c.bf16 %v985, %v980
        %v1014 = vpack.c.bf16 %v995, %v990
        %v1015 = vpack.c.bf16 %v1005, %v1000
        %v1024 = vunpack.c.l.b16 %v1008
        %v1025 = vunpack.c.h.b16 %v1008
        %v1026 = vunpack.c.l.b16 %v1009
        %v1027 = vunpack.c.h.b16 %v1009
        %v1028 = vunpack.c.l.b16 %v1010
        %v1029 = vunpack.c.h.b16 %v1010
        %v1030 = vunpack.c.l.b16 %v1011
        %v1031 = vunpack.c.h.b16 %v1011
        %v1032 = vunpack.c.l.b16 %v1012
        %v1033 = vunpack.c.h.b16 %v1012
        %v1034 = vunpack.c.l.b16 %v1013
        %v1035 = vunpack.c.h.b16 %v1013
        %v1036 = vunpack.c.l.b16 %v1014
        %v1037 = vunpack.c.h.b16 %v1014
        %v1038 = vunpack.c.l.b16 %v1015
        %v1039 = vunpack.c.h.b16 %v1015
        %v1040 = vpack.c.b16 %v1024, %v1024
        %v1041 = vpack.c.b16 %v1025, %v1025
        %v1042 = vpack.c.b16 %v1026, %v1026
        %v1043 = vpack.c.b16 %v1027, %v1027
        %v1044 = vpack.c.b16 %v1028, %v1028
        %v1045 = vpack.c.b16 %v1029, %v1029
        %v1046 = vpack.c.b16 %v1030, %v1030
        %v1047 = vpack.c.b16 %v1031, %v1031
        %v1048 = vpack.c.b16 %v1032, %v1032
        %v1049 = vpack.c.b16 %v1033, %v1033
        %v1050 = vpack.c.b16 %v1034, %v1034
        %v1051 = vpack.c.b16 %v1035, %v1035
        %v1052 = vpack.c.b16 %v1036, %v1036
        %v1053 = vpack.c.b16 %v1037, %v1037
        %v1054 = vpack.c.b16 %v1038, %v1038
        %v1055 = vpack.c.b16 %v1039, %v1039
        %vm1072 = vcmask 519168
        %1073 = vst.msk [vmem:[%s552] sm:$0xf] %vm1072, %v1040
        %1074 = vst.msk [vmem:[%s552 + $0x4] sm:$0xf] %vm1072, %v1041
        %1075 = vst.msk [vmem:[%s552 + $0x8] sm:$0xf] %vm1072, %v1042
        %1076 = vst.msk [vmem:[%s552 + $0xc] sm:$0xf] %vm1072, %v1043
        %1077 = vst.msk [vmem:[%s552 + $0x10] sm:$0xf] %vm1072, %v1044
        %1078 = vst.msk [vmem:[%s552 + $0x14] sm:$0xf] %vm1072, %v1045
        %1079 = vst.msk [vmem:[%s552 + $0x18] sm:$0xf] %vm1072, %v1046
        %1080 = vst.msk [vmem:[%s552 + $0x1c] sm:$0xf] %vm1072, %v1047
        %1081 = vst.msk [vmem:[%s552 + $0x20] sm:$0xf] %vm1072, %v1048
        %1082 = vst.msk [vmem:[%s552 + $0x24] sm:$0xf] %vm1072, %v1049
        %1083 = vst.msk [vmem:[%s552 + $0x28] sm:$0xf] %vm1072, %v1050
        %1084 = vst.msk [vmem:[%s552 + $0x2c] sm:$0xf] %vm1072, %v1051
        %1085 = vst.msk [vmem:[%s552 + $0x30] sm:$0xf] %vm1072, %v1052
        %1086 = vst.msk [vmem:[%s552 + $0x34] sm:$0xf] %vm1072, %v1053
        %1087 = vst.msk [vmem:[%s552 + $0x38] sm:$0xf] %vm1072, %v1054
        %1088 = vst.msk [vmem:[%s552 + $0x3c] sm:$0xf] %vm1072, %v1055
        %s1089 = sand.u32 %s268, 1
        %s1090 = scalar_lea.sflag [#allocation4], %s1089
        %s1091 = sand.u32 %s268, 1
        %s1092 = scalar_lea.vmem [#allocation10], %s1091
        %s1093 = sand.u32 %s296, 1
        %s1094 = scalar_lea.sflag [#allocation12], %s1093
        %s1095 = sand.u32 %s296, 1
        %s1096 = scalar_lea.vmem [#allocation11], %s1095
        %s1097 = smul.u32 16, %s41
        %p1098 = scmp.lt.s32.totalorder %s40, 1
        %s1099 = scalar_select %p1098, %s40, 1
        %p1100 = scmp.lt.s32.totalorder %s1097, 15
        %s1101 = scalar_select %p1100, %s1097, 15
        %s1102 = smul.addr %s1099, 16
        %s1103 = sadd.s32 %s1101, %s1102
        %s1104 = smul.addr %s1103, 4
        %s1105 = scalar_lea.vmem %s11, %s1104
        // Predicated region
        $region73: #{tpu_custom_call.1} parent=55 // pred_check
          %p1106 = pneg %p278
        $region74: #{tpu_custom_call.1} parent=55 // pred_check_branch
          %1108 = sbr.rel (%p1106) target = $region76
        $region75: #{tpu_custom_call.1} parent=55 // pred_region
          %s1110 = ssub.s32 16, 16
          %1111 = vsyncadd %s1090, %s1110
          %s1112 = sadd.s32 %s41, %s40
          %s1113 = smul.addr %s1112, 16
          %s1114 = scalar_lea.hbm %s9, %s1113
          %s1116 = sshll.u32 %s1092, 4
          %s1117 = int_to_ptr.vmem [resolvable:$true] %s1116
          %1119 = dma.vmem_to_hbm [thread:$0]  %s1117, 16, %s1114, %s1090
        $region76: #{tpu_custom_call.1} parent=55 // pred_fallthru
          _
        // Predicated region
        $region77: #{tpu_custom_call.1} parent=55 // pred_check
          %p1120 = pneg %p306
        $region78: #{tpu_custom_call.1} parent=55 // pred_check_branch
          %1122 = sbr.rel (%p1120) target = $region80
        $region79: #{tpu_custom_call.1} parent=55 // pred_region
          %s1124 = ssub.s32 16, 16
          %1125 = vsyncadd %s1094, %s1124
          %s1126 = sadd.s32 %s41, %s40
          %s1127 = smul.addr %s1126, 16
          %s1128 = scalar_lea.hbm %s10, %s1127
          %s1130 = sshll.u32 %s1096, 4
          %s1131 = int_to_ptr.vmem [resolvable:$true] %s1130
          %1133 = dma.vmem_to_hbm [thread:$0]  %s1131, 16, %s1128, %s1094
        $region80: #{tpu_custom_call.1} parent=55 // pred_fallthru
          _
        // Predicated region
        $region81: #{tpu_custom_call.1} parent=55 // pred_check
          %p1134 = pneg %p334
        $region82: #{tpu_custom_call.1} parent=55 // pred_check_branch
          %1136 = sbr.rel (%p1134) target = $region84
        $region83: #{tpu_custom_call.1} parent=55 // pred_region
          %s1137 = smul.u32 16, %s41
        $region84: #{tpu_custom_call.1} parent=55 // pred_fallthru
          _
      $region56: #{tpu_custom_call.1} parent=5 // pred_fallthru
        _
      %p1138 = scmp.le.s32.totalorder 2, %s31
      // Predicated region
      $region85: #{tpu_custom_call.1} parent=5 // pred_check
        %p1139 = pneg %p1138
      $region86: #{tpu_custom_call.1} parent=5 // pred_check_branch
        %1141 = sbr.rel (%p1139) target = $region88
      $region87: #{tpu_custom_call.1} parent=5 // pred_region
        %s1142 = ssub.s32 %s31, 2
        // Predicated region
        $region89: #{tpu_custom_call.1} parent=87 // pred_check
          %p1143 = pneg %p284
        $region90: #{tpu_custom_call.1} parent=87 // pred_check_branch
          %1145 = sbr.rel (%p1143) target = $region92
        $region91: #{tpu_custom_call.1} parent=87 // pred_region
          %s1146 = sand.u32 %s269, 1
          %s1147 = scalar_lea.sflag [#allocation4], %s1146
          %s1148 = sand.u32 %s269, 1
          %s1149 = scalar_lea.vmem [#allocation10], %s1148
          %1150 = dma.done %s1147, 16
        $region92: #{tpu_custom_call.1} parent=87 // pred_fallthru
          _
        // Predicated region
        $region93: #{tpu_custom_call.1} parent=87 // pred_check
          %p1151 = pneg %p312
        $region94: #{tpu_custom_call.1} parent=87 // pred_check_branch
          %1153 = sbr.rel (%p1151) target = $region96
        $region95: #{tpu_custom_call.1} parent=87 // pred_region
          %s1154 = sand.u32 %s297, 1
          %s1155 = scalar_lea.sflag [#allocation12], %s1154
          %s1156 = sand.u32 %s297, 1
          %s1157 = scalar_lea.vmem [#allocation11], %s1156
          %1158 = dma.done %s1155, 16
        $region96: #{tpu_custom_call.1} parent=87 // pred_fallthru
          _
        // Predicated region
        $region97: #{tpu_custom_call.1} parent=87 // pred_check
          %p1159 = pneg %p340
        $region98: #{tpu_custom_call.1} parent=87 // pred_check_branch
          %1161 = sbr.rel (%p1159) target = $region100
        $region99: #{tpu_custom_call.1} parent=87 // pred_region
          %s1162 = smul.u32 16, %s43
          %p1163 = scmp.lt.s32.totalorder %s42, 1
          %s1164 = scalar_select %p1163, %s42, 1
          %p1165 = scmp.lt.s32.totalorder %s1162, 15
          %s1166 = scalar_select %p1165, %s1162, 15
          %s1167 = smul.addr %s1164, 16
          %s1168 = sadd.s32 %s1166, %s1167
          %s1169 = smul.addr %s1168, 4
          %s1170 = scalar_lea.vmem %s11, %s1169
        $region100: #{tpu_custom_call.1} parent=87 // pred_fallthru
          _
      $region88: #{tpu_custom_call.1} parent=5 // pred_fallthru
        _
    $region6: #{tpu_custom_call.1} parent=1 // loop_footer
      %s35 = sadd.s32 1, %s31
    $region7: #{tpu_custom_call.1} parent=1 // loop_footer_branch
      %30 = sbr.rel target = $region3
    $region8: #{tpu_custom_call.1} parent=1 // loop_exit
      _
    %1171 = vsyncpa [#allocation3], 1
    %s1172 = scalar_lea.sflag [#allocation3], 1
    %1173 = vsyncpa %s1172, 1
    %1174 = vsyncpa [#allocation6], 1
    %s1175 = scalar_lea.sflag [#allocation6], 1
    %1176 = vsyncpa %s1175, 1
    %1177 = vsyncpa [#allocation9], 1
    %1178 = vsyncpa [#allocation4], 1
    %s1179 = scalar_lea.sflag [#allocation4], 1
    %1180 = vsyncpa %s1179, 1
    %1181 = vsyncpa [#allocation12], 1
    %s1182 = scalar_lea.sflag [#allocation12], 1
    %1183 = vsyncpa %s1182, 1

</llo_original>
